<compile_context>
chip_gen: v6e
topology: v6e:2x2x1
jax: 0.10.0
libtpu: 0.0.40
codegen_flags: <defaults>
</compile_context>

<pallas_src>
import jax
import jax.numpy as jnp
from jax.experimental import pallas as pl
from jax.experimental.pallas import tpu as pltpu


def _rnn_kernel(x_ref, w_ref, wh_ref, wln_ref, b_ref, bln_ref,
                hn_ref, yy_ref):
    # x_ref:   (B, T*D) VMEM  x flattened over (seq, feature); lanes 0:D == seq step 0
    # w_ref:   (D, H)   VMEM  input weight
    # wh_ref:  (1, H)   VMEM  recurrent weight
    # wln_ref: (1, H)   VMEM  readout weight as a row
    # b_ref:   (1,)     SMEM  scalar hidden bias
    # bln_ref: (1,)     SMEM  scalar readout bias
    # hn_ref:  (B, 1)   VMEM  output h_n
    # yy_ref:  (2, H)   VMEM  row 0 = y_h (last step), row 1 = y_hs (last step)
    D, H = w_ref.shape
    B = hn_ref.shape[0]

    # Static lane slice: first sequence step of every batch element.
    x_t = x_ref[:, 0:D]                                   # (B, D)
    wh = wh_ref[...]                                      # (1, H)

    # One MXU matmul for the input projection of every "time" step.
    # Result stays in vregs (one (8,32) f32 slab) -- no scratch round-trip.
    z = jnp.dot(x_t, w_ref[...],
                preferred_element_type=jnp.float32) + b_ref[0]   # (B, H)

    # Serial recurrence over the (small, static) batch dimension, fully
    # unrolled; body = VPU mul-add + EUP sigmoid, all state in vregs.
    y_h = jnp.zeros((1, H), jnp.float32)
    y_hs = jnp.zeros((1, H), jnp.float32)
    rows = []
    for t in range(B):
        y_h = z[t:t + 1, :] + y_hs * wh                   # (1, H)
        y_hs = jax.nn.sigmoid(y_h)                        # (1, H)
        rows.append(y_hs)

    # Consolidated (2, H) writeback for the last-step y_h / y_hs.
    yy_ref[...] = jnp.concatenate([y_h, y_hs], axis=0)

    # Hoisted readout: VPU multiply + cross-lane reduce (off the MXU path).
    yhs_all = jnp.concatenate(rows, axis=0)               # (B, H)
    hn_ref[...] = (jnp.sum(yhs_all * wln_ref[...], axis=-1, keepdims=True)
                   + bln_ref[0])


def vanilla_rnn_sigmoid_qsim(x, weight, weight_h, bias, weight_ln, bias_ln):
    """x: (B, T, D) float32, batch_first. Returns (h_n (B,1), y_h (1,H), y_hs (1,H))."""
    B, T, D = x.shape
    H = weight.shape[1]

    # Free row-major bitcast; the kernel picks out seq step 0 via a lane slice.
    x_flat = x.astype(jnp.float32).reshape(B, T * D)
    # (H, 1) -> (1, H): free bitcast for a contiguous vector.
    wln_row = weight_ln.astype(jnp.float32).reshape(1, H)

    vmem_full = lambda shape: pl.BlockSpec(shape, lambda: (0,) * len(shape))
    smem_scalar = pl.BlockSpec(memory_space=pltpu.MemorySpace.SMEM)

    out_shapes = (
        jax.ShapeDtypeStruct((B, 1), jnp.float32),   # h_n
        jax.ShapeDtypeStruct((2, H), jnp.float32),   # [y_h; y_hs] (last step)
    )

    h_n, yy = pl.pallas_call(
        _rnn_kernel,
        out_shape=out_shapes,
        in_specs=[
            vmem_full((B, T * D)),
            vmem_full((D, H)),
            vmem_full((1, H)),
            vmem_full((1, H)),
            smem_scalar,
            smem_scalar,
        ],
        out_specs=[
            vmem_full((B, 1)),
            vmem_full((2, H)),
        ],
    )(x_flat,
      weight.astype(jnp.float32),
      weight_h.astype(jnp.float32),
      wln_row,
      bias.reshape(1).astype(jnp.float32),
      bias_ln.reshape(1).astype(jnp.float32))

    y_h = yy[0:1, :]
    y_hs = yy[1:2, :]
    return h_n, y_h, y_hs


def _reference(x, weight, weight_h, bias, weight_ln, bias_ln):
    """Pure-JAX reference mirroring the PyTorch loop exactly."""
    B, T, D = x.shape
    H = weight.shape[1]
    x_t = jnp.transpose(x, (1, 0, 2))        # (T, B, D)
    bias_b = jnp.broadcast_to(bias.reshape(1, 1), (1, H))
    y_hs = jnp.zeros((1, H), jnp.float32)
    y_h = jnp.zeros((1, H), jnp.float32)
    h_n = jnp.zeros((B, 1), jnp.float32)
    for t in range(B):
        y_h = bias_b + x_t[0, t, :][None, :] @ weight + y_hs * weight_h
        y_hs = jax.nn.sigmoid(y_h)
        y_out = bias_ln.reshape(1, 1) + y_hs @ weight_ln
        h_n = h_n.at[t, :].set(y_out[0, :])
    return h_n, y_h, y_hs


if __name__ == "__main__":
    # Small, module-consistent shapes: batch, seq, input_size, hidden_size.
    B, T, D, H = 8, 4, 16, 32

    key = jax.random.PRNGKey(0)
    kx, kw, kwh, kb, kwln, kbln = jax.random.split(key, 6)

    x = jax.random.normal(kx, (B, T, D), dtype=jnp.float32)
    # torch.rand -> uniform [0, 1)
    weight = jax.random.uniform(kw, (D, H), dtype=jnp.float32)
    weight_h = jax.random.uniform(kwh, (1, H), dtype=jnp.float32)
    bias = jax.random.uniform(kb, (1,), dtype=jnp.float32)
    weight_ln = jax.random.uniform(kwln, (H, 1), dtype=jnp.float32)
    bias_ln = jax.random.uniform(kbln, (1,), dtype=jnp.float32)

    h_n, y_h, y_hs = vanilla_rnn_sigmoid_qsim(
        x, weight, weight_h, bias, weight_ln, bias_ln)
    jax.block_until_ready((h_n, y_h, y_hs))

    h_n_ref, y_h_ref, y_hs_ref = _reference(
        x, weight, weight_h, bias, weight_ln, bias_ln)

    assert h_n.shape == (B, 1) and y_h.shape == (1, H) and y_hs.shape == (1, H)
    assert jnp.allclose(h_n, h_n_ref, atol=1e-5, rtol=1e-5)
    assert jnp.allclose(y_h, y_h_ref, atol=1e-5, rtol=1e-5)
    assert jnp.allclose(y_hs, y_hs_ref, atol=1e-5, rtol=1e-5)

    print("KERNEL_OK")
</pallas_src>

<mosaic_0001>
module attributes {stable_mosaic.version = 11 : i64} {
  func.func @_rnn_kernel(%arg0: memref<8x64xf32, #tpu.memory_space<vmem>>, %arg1: memref<16x32xf32, #tpu.memory_space<vmem>>, %arg2: memref<1x32xf32, #tpu.memory_space<vmem>>, %arg3: memref<1x32xf32, #tpu.memory_space<vmem>>, %arg4: memref<1xf32, #tpu.memory_space<smem>>, %arg5: memref<1xf32, #tpu.memory_space<smem>>, %arg6: memref<8x1xf32, #tpu.memory_space<vmem>>, %arg7: memref<2x32xf32, #tpu.memory_space<vmem>>) attributes {dimension_semantics = [], scalar_prefetch = 0 : i64, scratch_operands = 0 : i64, tpu.core_type = #tpu.core_type<tc>} {
    %c0 = arith.constant 0 : index
    %c0_0 = arith.constant 0 : index
    %0 = vector.load %arg0[%c0, %c0_0] : memref<8x64xf32, #tpu.memory_space<vmem>>, vector<8x16xf32>
    %c0_1 = arith.constant 0 : index
    %c0_2 = arith.constant 0 : index
    %1 = vector.load %arg2[%c0_1, %c0_2] : memref<1x32xf32, #tpu.memory_space<vmem>>, vector<1x32xf32>
    %c0_3 = arith.constant 0 : index
    %c0_4 = arith.constant 0 : index
    %2 = vector.load %arg1[%c0_3, %c0_4] : memref<16x32xf32, #tpu.memory_space<vmem>>, vector<16x32xf32>
    %cst = arith.constant dense<0.000000e+00> : vector<8x32xf32>
    %3 = tpu.matmul %0, %2, %cst {dimension_numbers = #tpu.dot_dimension_numbers<[1], [0], [0], [1], [0, 0, 1, 1], [], []>} : vector<8x16xf32>, vector<16x32xf32>, vector<8x32xf32> -> vector<8x32xf32>
    %c0_5 = arith.constant 0 : index
    %4 = memref.load %arg4[%c0_5] : memref<1xf32, #tpu.memory_space<smem>>
    %5 = vector.broadcast %4 : f32 to vector<8x32xf32>
    %6 = arith.addf %3, %5 : vector<8x32xf32>
    %cst_6 = arith.constant 0.000000e+00 : f32
    %7 = vector.broadcast %cst_6 : f32 to vector<1x32xf32>
    %8 = vector.extract_strided_slice %6 {offsets = [0, 0], sizes = [1, 32], strides = [1, 1]} : vector<8x32xf32> to vector<1x32xf32>
    %9 = arith.mulf %7, %1 : vector<1x32xf32>
    %10 = arith.addf %8, %9 : vector<1x32xf32>
    %11 = arith.negf %10 : vector<1x32xf32>
    %12 = math.exp %11 : vector<1x32xf32>
    %cst_7 = arith.constant 1.000000e+00 : f32
    %13 = vector.broadcast %cst_7 : f32 to vector<1x32xf32>
    %14 = arith.addf %13, %12 : vector<1x32xf32>
    %15 = arith.divf %13, %14 : vector<1x32xf32>
    %16 = vector.extract_strided_slice %6 {offsets = [1, 0], sizes = [1, 32], strides = [1, 1]} : vector<8x32xf32> to vector<1x32xf32>
    %17 = arith.mulf %15, %1 : vector<1x32xf32>
    %18 = arith.addf %16, %17 : vector<1x32xf32>
    %19 = arith.negf %18 : vector<1x32xf32>
    %20 = math.exp %19 : vector<1x32xf32>
    %cst_8 = arith.constant 1.000000e+00 : f32
    %21 = vector.broadcast %cst_8 : f32 to vector<1x32xf32>
    %22 = arith.addf %21, %20 : vector<1x32xf32>
    %23 = arith.divf %21, %22 : vector<1x32xf32>
    %24 = vector.extract_strided_slice %6 {offsets = [2, 0], sizes = [1, 32], strides = [1, 1]} : vector<8x32xf32> to vector<1x32xf32>
    %25 = arith.mulf %23, %1 : vector<1x32xf32>
    %26 = arith.addf %24, %25 : vector<1x32xf32>
    %27 = arith.negf %26 : vector<1x32xf32>
    %28 = math.exp %27 : vector<1x32xf32>
    %cst_9 = arith.constant 1.000000e+00 : f32
    %29 = vector.broadcast %cst_9 : f32 to vector<1x32xf32>
    %30 = arith.addf %29, %28 : vector<1x32xf32>
    %31 = arith.divf %29, %30 : vector<1x32xf32>
    %32 = vector.extract_strided_slice %6 {offsets = [3, 0], sizes = [1, 32], strides = [1, 1]} : vector<8x32xf32> to vector<1x32xf32>
    %33 = arith.mulf %31, %1 : vector<1x32xf32>
    %34 = arith.addf %32, %33 : vector<1x32xf32>
    %35 = arith.negf %34 : vector<1x32xf32>
    %36 = math.exp %35 : vector<1x32xf32>
    %cst_10 = arith.constant 1.000000e+00 : f32
    %37 = vector.broadcast %cst_10 : f32 to vector<1x32xf32>
    %38 = arith.addf %37, %36 : vector<1x32xf32>
    %39 = arith.divf %37, %38 : vector<1x32xf32>
    %40 = vector.extract_strided_slice %6 {offsets = [4, 0], sizes = [1, 32], strides = [1, 1]} : vector<8x32xf32> to vector<1x32xf32>
    %41 = arith.mulf %39, %1 : vector<1x32xf32>
    %42 = arith.addf %40, %41 : vector<1x32xf32>
    %43 = arith.negf %42 : vector<1x32xf32>
    %44 = math.exp %43 : vector<1x32xf32>
    %cst_11 = arith.constant 1.000000e+00 : f32
    %45 = vector.broadcast %cst_11 : f32 to vector<1x32xf32>
    %46 = arith.addf %45, %44 : vector<1x32xf32>
    %47 = arith.divf %45, %46 : vector<1x32xf32>
    %48 = vector.extract_strided_slice %6 {offsets = [5, 0], sizes = [1, 32], strides = [1, 1]} : vector<8x32xf32> to vector<1x32xf32>
    %49 = arith.mulf %47, %1 : vector<1x32xf32>
    %50 = arith.addf %48, %49 : vector<1x32xf32>
    %51 = arith.negf %50 : vector<1x32xf32>
    %52 = math.exp %51 : vector<1x32xf32>
    %cst_12 = arith.constant 1.000000e+00 : f32
    %53 = vector.broadcast %cst_12 : f32 to vector<1x32xf32>
    %54 = arith.addf %53, %52 : vector<1x32xf32>
    %55 = arith.divf %53, %54 : vector<1x32xf32>
    %56 = vector.extract_strided_slice %6 {offsets = [6, 0], sizes = [1, 32], strides = [1, 1]} : vector<8x32xf32> to vector<1x32xf32>
    %57 = arith.mulf %55, %1 : vector<1x32xf32>
    %58 = arith.addf %56, %57 : vector<1x32xf32>
    %59 = arith.negf %58 : vector<1x32xf32>
    %60 = math.exp %59 : vector<1x32xf32>
    %cst_13 = arith.constant 1.000000e+00 : f32
    %61 = vector.broadcast %cst_13 : f32 to vector<1x32xf32>
    %62 = arith.addf %61, %60 : vector<1x32xf32>
    %63 = arith.divf %61, %62 : vector<1x32xf32>
    %64 = vector.extract_strided_slice %6 {offsets = [7, 0], sizes = [1, 32], strides = [1, 1]} : vector<8x32xf32> to vector<1x32xf32>
    %65 = arith.mulf %63, %1 : vector<1x32xf32>
    %66 = arith.addf %64, %65 : vector<1x32xf32>
    %67 = arith.negf %66 : vector<1x32xf32>
    %68 = math.exp %67 : vector<1x32xf32>
    %cst_14 = arith.constant 1.000000e+00 : f32
    %69 = vector.broadcast %cst_14 : f32 to vector<1x32xf32>
    %70 = arith.addf %69, %68 : vector<1x32xf32>
    %71 = arith.divf %69, %70 : vector<1x32xf32>
    %72 = tpu.concatenate %66, %71 in 0 : vector<1x32xf32>, vector<1x32xf32> -> vector<2x32xf32>
    %c0_15 = arith.constant 0 : index
    %c0_16 = arith.constant 0 : index
    %73 = vector.load %arg7[%c0_15, %c0_16] : memref<2x32xf32, #tpu.memory_space<vmem>>, vector<2x32xf32>
    tpu.vector_store %arg7[%c0_15, %c0_16], %72 {strides = array<i32>} : memref<2x32xf32, #tpu.memory_space<vmem>>, vector<2x32xf32>,
    %74 = tpu.concatenate %15, %23, %31, %39, %47, %55, %63, %71 in 0 : vector<1x32xf32>, vector<1x32xf32>, vector<1x32xf32>, vector<1x32xf32>, vector<1x32xf32>, vector<1x32xf32>, vector<1x32xf32>, vector<1x32xf32> -> vector<8x32xf32>
    %c0_17 = arith.constant 0 : index
    %c0_18 = arith.constant 0 : index
    %75 = vector.load %arg3[%c0_17, %c0_18] : memref<1x32xf32, #tpu.memory_space<vmem>>, vector<1x32xf32>
    %76 = vector.broadcast %75 : vector<1x32xf32> to vector<8x32xf32>
    %77 = arith.mulf %74, %76 : vector<8x32xf32>
    %cst_19 = arith.constant dense<0.000000e+00> : vector<8xf32>
    %78 = vector.multi_reduction <add>, %77, %cst_19 [1] : vector<8x32xf32> to vector<8xf32>
    %79 = vector.shape_cast %78 : vector<8xf32> to vector<8x1xf32>
    %c0_20 = arith.constant 0 : index
    %80 = memref.load %arg5[%c0_20] : memref<1xf32, #tpu.memory_space<smem>>
    %81 = vector.broadcast %80 : f32 to vector<8x1xf32>
    %82 = arith.addf %79, %81 : vector<8x1xf32>
    %c0_21 = arith.constant 0 : index
    %c0_22 = arith.constant 0 : index
    %83 = vector.load %arg6[%c0_21, %c0_22] : memref<8x1xf32, #tpu.memory_space<vmem>>, vector<8x1xf32>
    tpu.vector_store %arg6[%c0_21, %c0_22], %82 {strides = array<i32>} : memref<8x1xf32, #tpu.memory_space<vmem>>, vector<8x1xf32>,
    return
  }
}

</mosaic_0001>

<llo_original>
// kernel: tpu_custom_call.1
$region0: #{tpu_custom_call.1}
  #allocation0 [shape = 'u32[]', space=smem, size = 0x4, offset = 0x4, fixed_abs, tag = 'smem constant byte address 0x4 - core index']
  #allocation1 [shape = 'u32[144,128]{1,0:T(1,128)}', space=vmem, size = 0x12000, scoped, tag = 'internal scratch']
  #allocation2 [shape = 'f32[1]{0:T(128)S(6)}', space=smem, size = 0x200, scoped, tag = 'scoped memory for tpu_custom_call.1']
  #allocation3 [shape = 'f32[1]{0:T(128)S(6)}', space=smem, size = 0x200, scoped, tag = 'scoped memory for tpu_custom_call.1']
  %s0 = inlined_call_operand.hbm [shape: f32[8,64], index: 0, kind: input, shape index: {}]
  %s1 = inlined_call_operand.hbm [shape: f32[16,32], index: 1, kind: input, shape index: {}]
  %s2 = inlined_call_operand.vmem [shape: f32[1,32], index: 2, kind: input, shape index: {}]
  %s3 = inlined_call_operand.vmem [shape: f32[1,32], index: 3, kind: input, shape index: {}]
  %s4 = inlined_call_operand.<no memory space> [shape: f32[1], index: 4, kind: input, shape index: {}]
  %s5 = inlined_call_operand.<no memory space> [shape: f32[1], index: 5, kind: input, shape index: {}]
  %s6 = inlined_call_operand.vmem [shape: f32[8,1], index: 6, kind: output, shape index: {0}]
  %s7 = inlined_call_operand.hbm [shape: f32[2,32], index: 7, kind: output, shape index: {1}]
  %8 = xla_tuple %s6, %s7
  %s9 = sld [smem:[#allocation0]]
  $region50: #{tpu_custom_call.1} parent=0
    _
  %s11 = ssub.s32 1, %s9
  %s12 = scalar_select 0, %s11, %s9
  %13 = sst [smem:[#allocation2]] %s4
  %14 = sst [smem:[#allocation3]] %s5
  $region1: #{tpu_custom_call.1} parent=0
    #allocation4 [shape = 'u8[4096]{0}', space=vmem, size = 0x1000, scoped, tag = 'input window, operand 0, single buffered']
    #allocation5 [shape = 's32[1]{0}', space=sflag, size = 0x4, scoped, tag = 'scoped memory for tpu_custom_call.1']
    #allocation6 [shape = 's32[1]{0}', space=sflag, size = 0x4, scoped, tag = 'scoped memory for tpu_custom_call.1']
    #allocation7 [shape = 'u8[8192]{0}', space=vmem, size = 0x2000, scoped, tag = 'input window, operand 1, single buffered']
    #allocation8 [shape = 's32[1]{0}', space=sflag, size = 0x4, scoped, tag = 'scoped memory for tpu_custom_call.1']
    #allocation9 [shape = 'u8[1024]{0}', space=vmem, size = 0x400, scoped, tag = 'output window, operand 1, single buffered']
    %15 = vsyncpa [#allocation5], 0
    %16 = vsyncpa [#allocation8], 0
    %17 = vsyncpa [#allocation6], 0
    // Predicated region
    $region2: #{tpu_custom_call.1} parent=1 // pred_check
      _
    $region3: #{tpu_custom_call.1} parent=1 // pred_check_branch
      %19 = sbr.rel (0) target = $region5
    $region4: #{tpu_custom_call.1} parent=1 // pred_region
      %s21 = ssub.s32 128, 128
      %22 = vsyncadd [#allocation5], %s21
      %s24 = sshll.u32 [#allocation4], 4
      %s25 = int_to_ptr.vmem [resolvable:$true] %s24
      %27 = dma.hbm_to_vmem [thread:$0]  %s0, 128, %s25, [#allocation5]
    $region5: #{tpu_custom_call.1} parent=1 // pred_fallthru
      _
    // Predicated region
    $region6: #{tpu_custom_call.1} parent=1 // pred_check
      _
    $region7: #{tpu_custom_call.1} parent=1 // pred_check_branch
      %29 = sbr.rel (0) target = $region9
    $region8: #{tpu_custom_call.1} parent=1 // pred_region
      %s31 = ssub.s32 256, 256
      %32 = vsyncadd [#allocation8], %s31
      %s33 = sshll.u32 [#allocation7], 4
      %s34 = int_to_ptr.vmem [resolvable:$true] %s33
      %39 = dma.hbm_to_vmem [thread:$0]  %s1, 256, %s34, [#allocation8], 128, 128, 8
    $region9: #{tpu_custom_call.1} parent=1 // pred_fallthru
      _
    // Predicated region
    $region10: #{tpu_custom_call.1} parent=1 // pred_check
      _
    $region11: #{tpu_custom_call.1} parent=1 // pred_check_branch
      %41 = sbr.rel (0) target = $region13
    $region12: #{tpu_custom_call.1} parent=1 // pred_region
      _
    $region13: #{tpu_custom_call.1} parent=1 // pred_fallthru
      _
    // Predicated region
    $region14: #{tpu_custom_call.1} parent=1 // pred_check
      _
    $region15: #{tpu_custom_call.1} parent=1 // pred_check_branch
      %43 = sbr.rel (0) target = $region17
    $region16: #{tpu_custom_call.1} parent=1 // pred_region
      _
    $region17: #{tpu_custom_call.1} parent=1 // pred_fallthru
      _
    // Predicated region
    $region18: #{tpu_custom_call.1} parent=1 // pred_check
      _
    $region19: #{tpu_custom_call.1} parent=1 // pred_check_branch
      %45 = sbr.rel (0) target = $region21
    $region20: #{tpu_custom_call.1} parent=1 // pred_region
      _
    $region21: #{tpu_custom_call.1} parent=1 // pred_fallthru
      _
    // Predicated region
    $region22: #{tpu_custom_call.1} parent=1 // pred_check
      _
    $region23: #{tpu_custom_call.1} parent=1 // pred_check_branch
      %47 = sbr.rel (0) target = $region25
    $region24: #{tpu_custom_call.1} parent=1 // pred_region
      _
    $region25: #{tpu_custom_call.1} parent=1 // pred_fallthru
      _
    // Predicated region
    $region26: #{tpu_custom_call.1} parent=1 // pred_check
      _
    $region27: #{tpu_custom_call.1} parent=1 // pred_check_branch
      %49 = sbr.rel (0) target = $region29
    $region28: #{tpu_custom_call.1} parent=1 // pred_region
      %50 = dma.done [#allocation5], 128
    $region29: #{tpu_custom_call.1} parent=1 // pred_fallthru
      _
    // Predicated region
    $region30: #{tpu_custom_call.1} parent=1 // pred_check
      _
    $region31: #{tpu_custom_call.1} parent=1 // pred_check_branch
      %52 = sbr.rel (0) target = $region33
    $region32: #{tpu_custom_call.1} parent=1 // pred_region
      %53 = dma.done [#allocation8], 256
    $region33: #{tpu_custom_call.1} parent=1 // pred_fallthru
      _
    %v54 = vld [vmem:[#allocation4] sm:$0xff]
    %v55 = vld [vmem:[%s2] sm:$0x1]
    %v56 = vld [vmem:[#allocation7] sm:$0xff]
    %v57 = vld [vmem:[#allocation7 + $0x8] sm:$0xff]
    %s58 = sld [smem:[#allocation2]]
    %v59 = vstv %s58
    %vm60 = vcmask 130048
    %v62 = vsel %vm60, %v54, 0
    %64 = vmatprep.subr.mxu0 0.0
    %65 = vmatpush1.msra.mxu0 0.0
    %66 = vmatprep.subr.mxu0 0.0
    %67 = vmatpush1.msra.mxu0 0.0
    %68 = vmatprep.subr.mxu0 0.0
    %69 = vmatpush1.msra.mxu0 0.0
    %70 = vmatprep.subr.mxu0 0.0
    %71 = vmatpush1.msra.mxu0 0.0
    %72 = vmatprep.subr.mxu0 0.0
    %73 = vmatpush1.msra.mxu0 0.0
    %74 = vmatprep.subr.mxu0 0.0
    %75 = vmatpush1.msra.mxu0 0.0
    %76 = vmatprep.subr.mxu0 0.0
    %77 = vmatpush1.msra.mxu0 0.0
    %78 = vmatprep.subr.mxu0 0.0
    %79 = vmatpush1.msra.mxu0 0.0
    %80 = vmatprep.subr.mxu0 0.0
    %81 = vmatpush1.msra.mxu0 0.0
    %82 = vmatprep.subr.mxu0 0.0
    %83 = vmatpush1.msra.mxu0 0.0
    %84 = vmatprep.subr.mxu0 0.0
    %85 = vmatpush1.msra.mxu0 0.0
    %86 = vmatprep.subr.mxu0 0.0
    %87 = vmatpush1.msra.mxu0 0.0
    %88 = vmatprep.subr.mxu0 0.0
    %89 = vmatpush1.msra.mxu0 0.0
    %90 = vmatprep.subr.mxu0 0.0
    %91 = vmatpush1.msra.mxu0 0.0
    %92 = vmatprep.subr.mxu0 0.0
    %93 = vmatpush1.msra.mxu0 %v57
    %94 = vmatprep.subr.mxu0 0.0
    %95 = vmatpush1.msra.mxu0 %v56
    %96 = vmatprep.subr.mxu0 0.0
    %97 = vmatpush2.msra.mxu0 0.0
    %98 = vmatprep.subr.mxu0 0.0
    %99 = vmatpush2.msra.mxu0 0.0
    %100 = vmatprep.subr.mxu0 0.0
    %101 = vmatpush2.msra.mxu0 0.0
    %102 = vmatprep.subr.mxu0 0.0
    %103 = vmatpush2.msra.mxu0 0.0
    %104 = vmatprep.subr.mxu0 0.0
    %105 = vmatpush2.msra.mxu0 0.0
    %106 = vmatprep.subr.mxu0 0.0
    %107 = vmatpush2.msra.mxu0 0.0
    %108 = vmatprep.subr.mxu0 0.0
    %109 = vmatpush2.msra.mxu0 0.0
    %110 = vmatprep.subr.mxu0 0.0
    %111 = vmatpush2.msra.mxu0 0.0
    %112 = vmatprep.subr.mxu0 0.0
    %113 = vmatpush2.msra.mxu0 0.0
    %114 = vmatprep.subr.mxu0 0.0
    %115 = vmatpush2.msra.mxu0 0.0
    %116 = vmatprep.subr.mxu0 0.0
    %117 = vmatpush2.msra.mxu0 0.0
    %118 = vmatprep.subr.mxu0 0.0
    %119 = vmatpush2.msra.mxu0 0.0
    %120 = vmatprep.subr.mxu0 0.0
    %121 = vmatpush2.msra.mxu0 0.0
    %122 = vmatprep.subr.mxu0 0.0
    %123 = vmatpush2.msra.mxu0 0.0
    %124 = vmatprep.subr.mxu0 0.0
    %125 = vmatpush2.msra.mxu0 0.0
    %126 = vmatprep.subr.mxu0 0.0
    %127 = vmatpush2.msra.mxu0 0.0
    %128 = vmatprep.mubr.f32.mxu0 0.0
    %129 = vmatmul.mubr.f32.gmra.mxu0 %v62
    %v130 = vpop.f32.mrf.mxu0
    %v131 = vadd.f32 %v59, %v130
    %v132 = vpop.f32.mrf.mxu0
    %133 = vdwg.mxu0
    %v134 = vmul.f32 %v55, 0.0
    %v135 = vadd.f32 %v131, %v134
    %v136 = vxor.u32 %v135, 2147483648
    %v137 = vmul.f32 %v136, 1.442695
    %v138 = vpow.pop %v137
    %v139 = vadd.f32 %v138, 1.0
    %v140 = vrcp.pop %v139
    %v141 = vmul.f32 1.0, %v140
    %v142 = vmul.f32 %v141, %v55
    %v144 = vrot.slane %v142, 7
    %v146 = vadd.f32 %v131, %v144
    %v147 = vxor.u32 %v146, 2147483648
    %v148 = vmul.f32 %v147, 1.442695
    %v149 = vpow.pop %v148
    %v150 = vadd.f32 %v149, 1.0
    %v151 = vrcp.pop %v150
    %v152 = vmul.f32 1.0, %v151
    %v154 = vlaneseq
    %v155 = vshrl.u32 %v154, 7
    %v156 = vsub.s32 0, %v155
    %v157 = vrot.slane %v55, %v156
    %v159 = vmul.f32 %v152, %v157
    %v161 = vrot.slane %v159, 7
    %v163 = vadd.f32 %v131, %v161
    %v164 = vxor.u32 %v163, 2147483648
    %v165 = vmul.f32 %v164, 1.442695
    %v166 = vpow.pop %v165
    %v167 = vadd.f32 %v166, 1.0
    %v168 = vrcp.pop %v167
    %v169 = vmul.f32 1.0, %v168
    %v170 = vmul.f32 %v169, %v157
    %v172 = vrot.slane %v170, 7
    %v174 = vadd.f32 %v131, %v172
    %v175 = vxor.u32 %v174, 2147483648
    %v176 = vmul.f32 %v175, 1.442695
    %v177 = vpow.pop %v176
    %v178 = vadd.f32 %v177, 1.0
    %v179 = vrcp.pop %v178
    %v180 = vmul.f32 1.0, %v179
    %v181 = vmul.f32 %v180, %v157
    %v183 = vrot.slane %v181, 7
    %v185 = vadd.f32 %v131, %v183
    %v186 = vxor.u32 %v185, 2147483648
    %v187 = vmul.f32 %v186, 1.442695
    %v188 = vpow.pop %v187
    %v189 = vadd.f32 %v188, 1.0
    %v190 = vrcp.pop %v189
    %v191 = vmul.f32 1.0, %v190
    %v192 = vmul.f32 %v191, %v157
    %v194 = vrot.slane %v192, 7
    %v196 = vadd.f32 %v131, %v194
    %v197 = vxor.u32 %v196, 2147483648
    %v198 = vmul.f32 %v197, 1.442695
    %v199 = vpow.pop %v198
    %v200 = vadd.f32 %v199, 1.0
    %v201 = vrcp.pop %v200
    %v202 = vmul.f32 1.0, %v201
    %v203 = vmul.f32 %v202, %v157
    %v205 = vrot.slane %v203, 7
    %v207 = vadd.f32 %v131, %v205
    %v208 = vxor.u32 %v207, 2147483648
    %v209 = vmul.f32 %v208, 1.442695
    %v210 = vpow.pop %v209
    %v211 = vadd.f32 %v210, 1.0
    %v212 = vrcp.pop %v211
    %v213 = vmul.f32 1.0, %v212
    %v214 = vmul.f32 %v213, %v157
    %v216 = vrot.slane %v214, 7
    %v218 = vadd.f32 %v131, %v216
    %v219 = vxor.u32 %v218, 2147483648
    %v220 = vmul.f32 %v219, 1.442695
    %v221 = vpow.pop %v220
    %v222 = vadd.f32 %v221, 1.0
    %v223 = vrcp.pop %v222
    %v224 = vmul.f32 1.0, %v223
    %v226 = vrot.slane %v218, 7
    %v229 = vrot.slane %v224, 6
    %vm231 = vcmask 1040384
    %v232 = vsel %vm231, %v226, %v229
    %vm233 = vcmask 254976
    %234 = vst.msk [vmem:[#allocation9] sm:$0x3] %vm233, %v232
    %v235 = vsel %vm231, %v141, %v152
    %vm236 = vcmask 1041408
    %v237 = vsel %vm236, %v235, %v169
    %vm238 = vcmask 1042432
    %v239 = vsel %vm238, %v237, %v180
    %vm240 = vcmask 1043456
    %v241 = vsel %vm240, %v239, %v191
    %vm242 = vcmask 1044480
    %v243 = vsel %vm242, %v241, %v202
    %vm244 = vcmask 1045504
    %v245 = vsel %vm244, %v243, %v213
    %vm246 = vcmask 1046528
    %v247 = vsel %vm246, %v245, %v224
    %v248 = vld [vmem:[%s3] sm:$0x1]
    %v250 = vlaneseq
    %v251 = vshrl.u32 %v250, 7
    %v252 = vsub.s32 0, %v251
    %v253 = vrot.slane %v248, %v252
    %v255 = vmul.f32 %v247, %v253
    %vm256 = vcmask 261120
    %v257 = vsel %vm256, %v255, 0.0
    %258 = vadd.xlane.f32.xlu0 %v257
    %v259 = vpop.xlane.xlu0 %258
    %s260 = sld [smem:[#allocation3]]
    %v261 = vstv %s260
    %v262 = vadd.f32 %v259, %v261
    %vm263 = vcmask 7168
    %264 = vst.msk [vmem:[%s6] sm:$0xff] %vm263, %v262
    // Predicated region
    $region34: #{tpu_custom_call.1} parent=1 // pred_check
      _
    $region35: #{tpu_custom_call.1} parent=1 // pred_check_branch
      %266 = sbr.rel (0) target = $region37
    $region36: #{tpu_custom_call.1} parent=1 // pred_region
      _
    $region37: #{tpu_custom_call.1} parent=1 // pred_fallthru
      _
    // Predicated region
    $region38: #{tpu_custom_call.1} parent=1 // pred_check
      _
    $region39: #{tpu_custom_call.1} parent=1 // pred_check_branch
      %268 = sbr.rel (0) target = $region41
    $region40: #{tpu_custom_call.1} parent=1 // pred_region
      %s270 = ssub.s32 32, 32
      %271 = vsyncadd [#allocation6], %s270
      %s273 = sshll.u32 [#allocation9], 4
      %s274 = int_to_ptr.vmem [resolvable:$true] %s273
      %276 = dma.vmem_to_hbm [thread:$0]  %s274, 32, %s7, [#allocation6]
    $region41: #{tpu_custom_call.1} parent=1 // pred_fallthru
      _
    // Predicated region
    $region42: #{tpu_custom_call.1} parent=1 // pred_check
      _
    $region43: #{tpu_custom_call.1} parent=1 // pred_check_branch
      %278 = sbr.rel (0) target = $region45
    $region44: #{tpu_custom_call.1} parent=1 // pred_region
      _
    $region45: #{tpu_custom_call.1} parent=1 // pred_fallthru
      _
    // Predicated region
    $region46: #{tpu_custom_call.1} parent=1 // pred_check
      _
    $region47: #{tpu_custom_call.1} parent=1 // pred_check_branch
      %280 = sbr.rel (0) target = $region49
    $region48: #{tpu_custom_call.1} parent=1 // pred_region
      %281 = dma.done [#allocation6], 32
    $region49: #{tpu_custom_call.1} parent=1 // pred_fallthru
      _
    %282 = vsyncpa [#allocation5], 1
    %283 = vsyncpa [#allocation8], 1
    %284 = vsyncpa [#allocation6], 1

</llo_original>
